<compile_context>
chip_gen: v7x
topology: tpu7x:2x2x1
jax: 0.10.0
libtpu: 0.0.40
codegen_flags: <defaults>
</compile_context>

<pallas_src>
import math
import jax
import jax.numpy as jnp
from jax.experimental import pallas as pl
from jax.experimental.pallas import tpu as pltpu


def _embedding_kernel(x_ref, w_ref, o_ref):
    # x_ref: (tr, Cp) packed tile of rows; w_ref: (Cp, Cp) block-diagonal weight.
    o_ref[...] = jnp.dot(
        x_ref[...], w_ref[...], preferred_element_type=jnp.float32
    ).astype(o_ref.dtype)


def _round_up(x, m):
    return -(-x // m) * m


def _chip_limits():
    """(max packed rows per tile, vmem_limit_bytes), sized per TPU generation."""
    try:
        vmem = pltpu.get_tpu_info().vmem_capacity_bytes
    except Exception:
        vmem = 64 * 1024 * 1024  # conservative (v7x-sized) fallback
    if vmem >= 100 * 1024 * 1024:
        # v5e / v6e: 128 MiB VMEM -> 8 MiB tiles, raised scoped-vmem limit.
        return 16384, 64 * 1024 * 1024
    # v7x: 64 MiB physical VMEM -> 4 MiB tiles, default 32 MiB scoped limit.
    return 8192, 32 * 1024 * 1024


def embedding_forward(x, weight, *, tile_rows=None):
    """x: (B, HWD, C); weight: (C, C). Returns x @ weight per batch: (B, HWD, C)."""
    B, HWD, C = x.shape
    assert weight.shape == (C, C)

    # ---- lane packing: smallest pack with (C*pack) % 128 == 0, i.e. Cp = lcm(C,128) ----
    pack = 128 // math.gcd(C, 128)
    if C * pack > 1024:        # cap the kron'd weight; fall back to unpacked
        pack = 1
    Cp = C * pack

    # Block-diagonal weight (pack copies of W on the diagonal), built once.
    if pack > 1:
        w_packed = jnp.kron(jnp.eye(pack, dtype=weight.dtype), weight)
    else:
        w_packed = weight

    # ---- flatten batch into the row axis; pad only if pack doesn't divide M (rare) ----
    M = B * HWD
    x_flat = x.reshape(M, C)
    pad_rows = 0
    if pack > 1 and M % pack != 0:
        pad_rows = _round_up(M, pack) - M          # < pack rows; rare path
        x_flat = jnp.pad(x_flat, ((0, pad_rows), (0, 0)))
    Mp = M + pad_rows
    R = Mp // pack
    x_packed = x_flat.reshape(R, Cp)               # contiguous, free view

    # ---- tile sizing: dtype-aligned, per-chip capped, >=2 grid steps when possible ----
    itemsize = jnp.dtype(x.dtype).itemsize
    sub = max(8, 32 // itemsize)                   # 8 f32 / 16 bf16 / 32 int8
    tr_max, vmem_limit = _chip_limits()
    if tile_rows is not None:
        tr_max = tile_rows
    tr = min(_round_up(tr_max, sub), _round_up(R, sub))
    if pl.cdiv(R, tr) == 1 and R > sub:
        # split so ("parallel",) can shard across v7x's two TensorCores
        tr = _round_up(pl.cdiv(R, 2), sub)
    grid = (pl.cdiv(R, tr),)                       # ragged last block handled by Pallas

    out_packed = pl.pallas_call(
        _embedding_kernel,
        out_shape=jax.ShapeDtypeStruct((R, Cp), x.dtype),
        grid_spec=pltpu.PrefetchScalarGridSpec(
            num_scalar_prefetch=0,
            grid=grid,
            in_specs=[
                # streamed, lane-dense (tr, Cp) tiles of packed rows
                pl.BlockSpec((tr, Cp), lambda i: (i, 0)),
                # constant index_map -> weight lands in VMEM once, no per-step DMA
                pl.BlockSpec((Cp, Cp), lambda i: (0, 0)),
            ],
            out_specs=pl.BlockSpec((tr, Cp), lambda i: (i, 0)),
        ),
        compiler_params=pltpu.CompilerParams(
            dimension_semantics=("parallel",),
            vmem_limit_bytes=vmem_limit,
        ),
        cost_estimate=pl.CostEstimate(
            flops=2 * R * Cp * Cp,                 # includes the pack factor
            transcendentals=0,
            bytes_accessed=(2 * R * Cp + Cp * Cp) * itemsize,
        ),
    )(x_packed, w_packed)

    # unpack: (R, Cp) -> (Mp, C) -> drop the (rare) pad rows -> (B, HWD, C)
    out_flat = out_packed.reshape(Mp, C)
    if pad_rows:
        out_flat = out_flat[:M]
    return out_flat.reshape(B, HWD, C)


def init_embedding_weight(key, channels):
    """kaiming_uniform_(a=sqrt(5)) on a (channels, channels) weight:
    bound = 1/sqrt(fan_in), fan_in = channels (matches PyTorch)."""
    fan_in = channels
    gain = math.sqrt(2.0 / (1.0 + 5.0))            # a = sqrt(5)
    bound = gain * math.sqrt(3.0 / fan_in)         # == 1/sqrt(fan_in)
    return jax.random.uniform(
        key, (channels, channels), dtype=jnp.float32, minval=-bound, maxval=bound
    )


if __name__ == "__main__":
    key = jax.random.PRNGKey(0)
    k_w, k_x = jax.random.split(key)

    B = 2
    C = 32          # channels
    HWD = 64        # flattened spatial (e.g. 4*4*4)

    weight = init_embedding_weight(k_w, C)
    x = jax.random.normal(k_x, (B, HWD, C), dtype=jnp.float32)

    out = jax.block_until_ready(embedding_forward(x, weight))
    ref = jnp.einsum("bmc,cd->bmd", x, weight)
    assert out.shape == (B, HWD, C)
    assert jnp.allclose(out, ref, atol=1e-5, rtol=1e-5)

    # ragged spatial size (M not divisible by pack) exercises the rare pad path
    # and a ragged last grid block (masked boundary stores).
    x2 = jax.random.normal(jax.random.PRNGKey(1), (B, 49, C), dtype=jnp.float32)
    out2 = jax.block_until_ready(embedding_forward(x2, weight))
    ref2 = jnp.einsum("bmc,cd->bmd", x2, weight)
    assert jnp.allclose(out2, ref2, atol=1e-5, rtol=1e-5)

    # channel count that is not a divisor of 128 exercises the lcm lane-packing
    C3 = 48
    w3 = init_embedding_weight(jax.random.PRNGKey(2), C3)
    x3 = jax.random.normal(jax.random.PRNGKey(3), (B, HWD, C3), dtype=jnp.float32)
    out3 = jax.block_until_ready(embedding_forward(x3, w3))
    ref3 = jnp.einsum("bmc,cd->bmd", x3, w3)
    assert jnp.allclose(out3, ref3, atol=1e-5, rtol=1e-5)

    print("KERNEL_OK")
</pallas_src>

<mosaic_0001>
module attributes {stable_mosaic.version = 11 : i64} {
  func.func @_embedding_kernel(%arg0: i32, %arg1: memref<16x128xf32, #tpu.memory_space<vmem>>, %arg2: memref<128x128xf32, #tpu.memory_space<vmem>>, %arg3: memref<16x128xf32, #tpu.memory_space<vmem>>) attributes {dimension_semantics = [#tpu.dimension_semantics<parallel>], iteration_bounds = array<i64: 2>, scalar_prefetch = 0 : i64, scratch_operands = 0 : i64, tpu.core_type = #tpu.core_type<tc>, window_params = [{transform_indices = @transform_0, window_bounds = array<i64: 16, 128>}, {pipeline_mode = #tpu.pipeline_mode<synchronous>, transform_indices = @transform_1, window_bounds = array<i64: 128, 128>}, {transform_indices = @transform_2, window_bounds = array<i64: 16, 128>}]} {
    %c0 = arith.constant 0 : index
    %c0_0 = arith.constant 0 : index
    %0 = vector.load %arg1[%c0, %c0_0] : memref<16x128xf32, #tpu.memory_space<vmem>>, vector<16x128xf32>
    %c0_1 = arith.constant 0 : index
    %c0_2 = arith.constant 0 : index
    %1 = vector.load %arg2[%c0_1, %c0_2] : memref<128x128xf32, #tpu.memory_space<vmem>>, vector<128x128xf32>
    %cst = arith.constant dense<0.000000e+00> : vector<16x128xf32>
    %2 = tpu.matmul %0, %1, %cst {dimension_numbers = #tpu.dot_dimension_numbers<[1], [0], [0], [1], [0, 0, 1, 1], [], []>} : vector<16x128xf32>, vector<128x128xf32>, vector<16x128xf32> -> vector<16x128xf32>
    %c0_3 = arith.constant 0 : index
    %c0_4 = arith.constant 0 : index
    %3 = vector.load %arg3[%c0_3, %c0_4] : memref<16x128xf32, #tpu.memory_space<vmem>>, vector<16x128xf32>
    tpu.vector_store %arg3[%c0_3, %c0_4], %2 {strides = array<i32>} : memref<16x128xf32, #tpu.memory_space<vmem>>, vector<16x128xf32>,
    return
  }
  func.func @transform_0(%arg0: i32) -> (i32, i32) {
    %c0_i32 = arith.constant 0 : i32
    %c0_i32_0 = arith.constant 0 : i32
    return %arg0, %c0_i32 : i32, i32
  }
  func.func @transform_1(%arg0: i32) -> (i32, i32) {
    %c0_i32 = arith.constant 0 : i32
    %c0_i32_0 = arith.constant 0 : i32
    %c0_i32_1 = arith.constant 0 : i32
    return %c0_i32, %c0_i32_0 : i32, i32
  }
  func.func @transform_2(%arg0: i32) -> (i32, i32) {
    %c0_i32 = arith.constant 0 : i32
    %c0_i32_0 = arith.constant 0 : i32
    return %arg0, %c0_i32 : i32, i32
  }
}

</mosaic_0001>

<llo_original>
// kernel: tpu_custom_call.1
$region0: #{tpu_custom_call.1}
  #allocation0 [shape = 'u32[]', space=smem, size = 0x4, offset = 0x4, fixed_abs, tag = 'smem constant byte address 0x4 - core index']
  #allocation1 [shape = 'u32[144,128]{1,0:T(1,128)}', space=vmem, size = 0x12000, scoped, tag = 'internal scratch']
  %s0 = inlined_call_operand.hbm [shape: f32[32,128], index: 0, kind: input, shape index: {}]
  %s1 = inlined_call_operand.hbm [shape: f32[128,128], index: 1, kind: input, shape index: {}]
  %s2 = inlined_call_operand.hbm [shape: f32[32,128], index: 2, kind: output, shape index: {}]
  %s3 = sld [smem:[#allocation0]]
  $region49: #{tpu_custom_call.1} parent=0
    _
  %s5 = ssub.s32 1, %s3
  %s6 = scalar_select 0, %s5, %s3
  $region1: #{tpu_custom_call.1} parent=0
    #allocation2 [shape = 'u8[16384]{0}', space=vmem, size = 0x4000, scoped, tag = 'input window, operand 0']
    #allocation3 [shape = 's32[2]{0}', space=sflag, size = 0x8, scoped, tag = 'scoped memory for tpu_custom_call.1']
    #allocation4 [shape = 's32[2]{0}', space=sflag, size = 0x8, scoped, tag = 'scoped memory for tpu_custom_call.1']
    #allocation5 [shape = 'u8[65536]{0}', space=vmem, size = 0x10000, scoped, tag = 'input window, operand 1, single buffered']
    #allocation6 [shape = 's32[1]{0}', space=sflag, size = 0x4, scoped, tag = 'scoped memory for tpu_custom_call.1']
    #allocation7 [shape = 'u8[16384]{0}', space=vmem, size = 0x4000, scoped, tag = 'output window, operand 0']
    %7 = vsyncpa [#allocation3], 0
    %s8 = scalar_lea.sflag [#allocation3], 1
    %9 = vsyncpa %s8, 0
    %10 = vsyncpa [#allocation6], 0
    %11 = vsyncpa [#allocation4], 0
    %s12 = scalar_lea.sflag [#allocation4], 1
    %13 = vsyncpa %s12, 0
    loop: start=0, step=1, limit=4
    $region2: #{tpu_custom_call.1} parent=1 // loop_pre_header
      _
    $region3: #{tpu_custom_call.1} parent=1 // loop_header
      %s15 = sphi 0, %s19
      %p16 = scmp.ge.s32.totalorder %s15, 4
      %s25 = sphi 0, %s27
      %s28 = sphi 0, %s25
      %s29 = sphi 0, %s28
      %s45 = sphi 0, %s29
      %s49 = sphi 0, %s49
      %s51 = sphi 0, %s49
      %s52 = sphi 0, %s51
      %s66 = sphi 0, %s52
      %s72 = sphi 0, %s74
      %s75 = sphi 0, %s72
      %s76 = sphi 0, %s75
      %s92 = sphi 0, %s76
    $region4: #{tpu_custom_call.1} parent=1 // loop_header_branch
      %18 = sbr.rel (%p16) target = $region8
    $region5: #{tpu_custom_call.1} parent=1 // loop_body
      %s20 = ssub.s32 %s15, 1
      %s21 = ssub.s32 %s15, 2
      %s22 = sadd.s32 %s15, 1
      %s23 = ssub.s32 %s15, %s22
      %p24 = scmp.eq.s32.totalorder %s23, 0
      %s26 = sadd.s32 %s25, 1
      %s27 = scalar_select %p24, %s25, %s26
      %p30 = pneg %p24
      %p31 = scmp.eq.s32.totalorder %s15, 1
      %p32 = por %p30, %p31
      %p33 = scmp.ne.s32.totalorder %s25, %s28
      %p34 = scmp.eq.s32.totalorder %s15, 0
      %p35 = por %p33, %p34
      %p36 = scmp.ne.s32.totalorder %s25, %s28
      %p37 = scmp.eq.s32.totalorder %s20, 1
      %p38 = por %p36, %p37
      %p39 = scmp.ne.s32.totalorder %s28, %s29
      %p40 = scmp.eq.s32.totalorder %s20, 0
      %p41 = por %p39, %p40
      %p42 = scmp.ne.s32.totalorder %s28, %s29
      %p43 = scmp.eq.s32.totalorder %s21, 1
      %p44 = por %p42, %p43
      %p46 = scmp.ne.s32.totalorder %s29, %s45
      %p47 = scmp.eq.s32.totalorder %s21, 0
      %p48 = por %p46, %p47
      %s50 = sadd.s32 %s49, 1
      %p53 = scmp.eq.s32.totalorder %s15, 1
      %p54 = scmp.ne.s32.totalorder %s49, %s51
      %p55 = scmp.eq.s32.totalorder %s15, 0
      %p56 = por %p54, %p55
      %p57 = scmp.ne.s32.totalorder %s49, %s51
      %p58 = scmp.eq.s32.totalorder %s20, 1
      %p59 = por %p57, %p58
      %p60 = scmp.ne.s32.totalorder %s51, %s52
      %p61 = scmp.eq.s32.totalorder %s20, 0
      %p62 = por %p60, %p61
      %p63 = scmp.ne.s32.totalorder %s51, %s52
      %p64 = scmp.eq.s32.totalorder %s21, 1
      %p65 = por %p63, %p64
      %p67 = scmp.ne.s32.totalorder %s52, %s66
      %p68 = scmp.eq.s32.totalorder %s21, 0
      %p69 = por %p67, %p68
      %s70 = ssub.s32 %s15, %s22
      %p71 = scmp.eq.s32.totalorder %s70, 0
      %s73 = sadd.s32 %s72, 1
      %s74 = scalar_select %p71, %s72, %s73
      %p77 = pneg %p71
      %p78 = scmp.eq.s32.totalorder %s15, 1
      %p79 = por %p77, %p78
      %p80 = scmp.ne.s32.totalorder %s72, %s75
      %p81 = scmp.eq.s32.totalorder %s15, 0
      %p82 = por %p80, %p81
      %p83 = scmp.ne.s32.totalorder %s72, %s75
      %p84 = scmp.eq.s32.totalorder %s20, 1
      %p85 = por %p83, %p84
      %p86 = scmp.ne.s32.totalorder %s75, %s76
      %p87 = scmp.eq.s32.totalorder %s20, 0
      %p88 = por %p86, %p87
      %p89 = scmp.ne.s32.totalorder %s75, %s76
      %p90 = scmp.eq.s32.totalorder %s21, 1
      %p91 = por %p89, %p90
      %p93 = scmp.ne.s32.totalorder %s76, %s92
      %p94 = scmp.eq.s32.totalorder %s21, 0
      %p95 = por %p93, %p94
      %p96 = scmp.le.s32.totalorder 1, %s15
      %p97 = scmp.lt.s32.totalorder %s15, 3
      %p98 = pnand %p96, %p97
      %p99 = pneg %p98
      // Predicated region
      $region9: #{tpu_custom_call.1} parent=5 // pred_check
        _
      $region10: #{tpu_custom_call.1} parent=5 // pred_check_branch
        %101 = sbr.rel (%p98) target = $region12
      $region11: #{tpu_custom_call.1} parent=5 // pred_region
        %s102 = ssub.s32 %s15, 1
        // Predicated region
        $region13: #{tpu_custom_call.1} parent=11 // pred_check
          %p103 = pneg %p62
        $region14: #{tpu_custom_call.1} parent=11 // pred_check_branch
          %105 = sbr.rel (%p103) target = $region16
        $region15: #{tpu_custom_call.1} parent=11 // pred_region
          %s107 = ssub.s32 2048, 2048
          %108 = vsyncadd [#allocation6], %s107
          %s109 = sshll.u32 [#allocation5], 4
          %s110 = int_to_ptr.vmem [resolvable:$true] %s109
          %115 = dma.hbm_to_vmem [thread:$0]  %s1, 2048, %s110, [#allocation6], 128, 128, 8
        $region16: #{tpu_custom_call.1} parent=11 // pred_fallthru
          _
      $region12: #{tpu_custom_call.1} parent=5 // pred_fallthru
        _
      %p116 = scmp.lt.s32.totalorder %s15, 2
      // Predicated region
      $region17: #{tpu_custom_call.1} parent=5 // pred_check
        %p117 = pneg %p116
      $region18: #{tpu_custom_call.1} parent=5 // pred_check_branch
        %119 = sbr.rel (%p117) target = $region20
      $region19: #{tpu_custom_call.1} parent=5 // pred_region
        // Predicated region
        $region21: #{tpu_custom_call.1} parent=19 // pred_check
          %p120 = pneg %p35
        $region22: #{tpu_custom_call.1} parent=19 // pred_check_branch
          %122 = sbr.rel (%p120) target = $region24
        $region23: #{tpu_custom_call.1} parent=19 // pred_region
          %s123 = sand.u32 %s25, 1
          %s124 = scalar_lea.sflag [#allocation3], %s123
          %s125 = sand.u32 %s25, 1
          %s126 = smul.addr %s125, 16
          %s127 = scalar_lea.vmem [#allocation2], %s126
          %s128 = smul.u32 2, %s15
          %s130 = ssub.s32 256, 256
          %131 = vsyncadd %s124, %s130
          %s132 = smul.addr %s128, 128
          %s133 = scalar_lea.hbm %s0, %s132
          %s134 = sshll.u32 %s127, 4
          %s135 = int_to_ptr.vmem [resolvable:$true] %s134
          %140 = dma.hbm_to_vmem [thread:$0]  %s133, 256, %s135, %s124, 128, 128, 8
        $region24: #{tpu_custom_call.1} parent=19 // pred_fallthru
          _
      $region20: #{tpu_custom_call.1} parent=5 // pred_fallthru
        _
      %p141 = scmp.le.s32.totalorder 1, %s15
      %p142 = scmp.lt.s32.totalorder %s15, 3
      %p143 = pnand %p141, %p142
      %p144 = pneg %p143
      // Predicated region
      $region25: #{tpu_custom_call.1} parent=5 // pred_check
        _
      $region26: #{tpu_custom_call.1} parent=5 // pred_check_branch
        %146 = sbr.rel (%p143) target = $region28
      $region27: #{tpu_custom_call.1} parent=5 // pred_region
        %s147 = ssub.s32 %s15, 1
        %s148 = sand.u32 %s28, 1
        %s149 = scalar_lea.sflag [#allocation3], %s148
        %s150 = sand.u32 %s28, 1
        %s151 = smul.addr %s150, 16
        %s152 = scalar_lea.vmem [#allocation2], %s151
        // Predicated region
        $region29: #{tpu_custom_call.1} parent=27 // pred_check
          %p153 = pneg %p41
        $region30: #{tpu_custom_call.1} parent=27 // pred_check_branch
          %155 = sbr.rel (%p153) target = $region32
        $region31: #{tpu_custom_call.1} parent=27 // pred_region
          %156 = dma.done %s149, 256
        $region32: #{tpu_custom_call.1} parent=27 // pred_fallthru
          _
        // Predicated region
        $region33: #{tpu_custom_call.1} parent=27 // pred_check
          %p157 = pneg %p62
        $region34: #{tpu_custom_call.1} parent=27 // pred_check_branch
          %159 = sbr.rel (%p157) target = $region36
        $region35: #{tpu_custom_call.1} parent=27 // pred_region
          %160 = dma.done [#allocation6], 2048
        $region36: #{tpu_custom_call.1} parent=27 // pred_fallthru
          _
        %s161 = sand.u32 %s28, 1
        %s162 = scalar_lea.sflag [#allocation3], %s161
        %s163 = sand.u32 %s28, 1
        %s164 = smul.addr %s163, 16
        %s165 = scalar_lea.vmem [#allocation2], %s164
        %p166 = pneg %p41
        %p167 = pneg %p38
        %p168 = pneg %p62
        %p169 = pneg %p59
        %p170 = pneg %p88
        %p171 = pneg %p85
        %s172 = sand.u32 %s75, 1
        %s173 = scalar_lea.sflag [#allocation4], %s172
        %s174 = sand.u32 %s75, 1
        %s175 = smul.addr %s174, 16
        %s176 = scalar_lea.vmem [#allocation7], %s175
        %s177 = smul.u32 2, %s20
        %s178 = smul.u32 2, %s20
        %v179 = vld [vmem:[%s152] sm:$0xff]
        %v180 = vld [vmem:[%s152 + $0x8] sm:$0xff]
        %v181 = vld [vmem:[#allocation5] sm:$0xff]
        %v182 = vld [vmem:[#allocation5 + $0x8] sm:$0xff]
        %v183 = vld [vmem:[#allocation5 + $0x10] sm:$0xff]
        %v184 = vld [vmem:[#allocation5 + $0x18] sm:$0xff]
        %v185 = vld [vmem:[#allocation5 + $0x20] sm:$0xff]
        %v186 = vld [vmem:[#allocation5 + $0x28] sm:$0xff]
        %v187 = vld [vmem:[#allocation5 + $0x30] sm:$0xff]
        %v188 = vld [vmem:[#allocation5 + $0x38] sm:$0xff]
        %v189 = vld [vmem:[#allocation5 + $0x40] sm:$0xff]
        %v190 = vld [vmem:[#allocation5 + $0x48] sm:$0xff]
        %v191 = vld [vmem:[#allocation5 + $0x50] sm:$0xff]
        %v192 = vld [vmem:[#allocation5 + $0x58] sm:$0xff]
        %v193 = vld [vmem:[#allocation5 + $0x60] sm:$0xff]
        %v194 = vld [vmem:[#allocation5 + $0x68] sm:$0xff]
        %v195 = vld [vmem:[#allocation5 + $0x70] sm:$0xff]
        %v196 = vld [vmem:[#allocation5 + $0x78] sm:$0xff]
        %197 = vmatprep.subr.mxu0 0.0
        %198 = vmatpush1.msra.mxu0 %v181
        %199 = vmatprep.subr.mxu0 0.0
        %200 = vmatpush1.msra.mxu0 %v182
        %201 = vmatprep.subr.mxu0 0.0
        %202 = vmatpush1.msra.mxu0 %v183
        %203 = vmatprep.subr.mxu0 0.0
        %204 = vmatpush1.msra.mxu0 %v184
        %205 = vmatprep.subr.mxu0 0.0
        %206 = vmatpush1.msra.mxu0 %v185
        %207 = vmatprep.subr.mxu0 0.0
        %208 = vmatpush1.msra.mxu0 %v186
        %209 = vmatprep.subr.mxu0 0.0
        %210 = vmatpush1.msra.mxu0 %v187
        %211 = vmatprep.subr.mxu0 0.0
        %212 = vmatpush1.msra.mxu0 %v188
        %213 = vmatprep.subr.mxu0 0.0
        %214 = vmatpush1.msra.mxu0 %v189
        %215 = vmatprep.subr.mxu0 0.0
        %216 = vmatpush1.msra.mxu0 %v190
        %217 = vmatprep.subr.mxu0 0.0
        %218 = vmatpush1.msra.mxu0 %v191
        %219 = vmatprep.subr.mxu0 0.0
        %220 = vmatpush1.msra.mxu0 %v192
        %221 = vmatprep.subr.mxu0 0.0
        %222 = vmatpush1.msra.mxu0 %v193
        %223 = vmatprep.subr.mxu0 0.0
        %224 = vmatpush1.msra.mxu0 %v194
        %225 = vmatprep.subr.mxu0 0.0
        %226 = vmatpush1.msra.mxu0 %v195
        %227 = vmatprep.subr.mxu0 0.0
        %228 = vmatpush1.msra.mxu0 %v196
        %229 = vmatprep.subr.mxu0 0.0
        %230 = vmatpush1.msra.mxu0 0.0
        %231 = vmatprep.subr.mxu0 0.0
        %232 = vmatpush1.msra.mxu0 0.0
        %233 = vmatprep.subr.mxu0 0.0
        %234 = vmatpush1.msra.mxu0 0.0
        %235 = vmatprep.subr.mxu0 0.0
        %236 = vmatpush1.msra.mxu0 0.0
        %237 = vmatprep.subr.mxu0 0.0
        %238 = vmatpush1.msra.mxu0 0.0
        %239 = vmatprep.subr.mxu0 0.0
        %240 = vmatpush1.msra.mxu0 0.0
        %241 = vmatprep.subr.mxu0 0.0
        %242 = vmatpush1.msra.mxu0 0.0
        %243 = vmatprep.subr.mxu0 0.0
        %244 = vmatpush1.msra.mxu0 0.0
        %245 = vmatprep.subr.mxu0 0.0
        %246 = vmatpush1.msra.mxu0 0.0
        %247 = vmatprep.subr.mxu0 0.0
        %248 = vmatpush1.msra.mxu0 0.0
        %249 = vmatprep.subr.mxu0 0.0
        %250 = vmatpush1.msra.mxu0 0.0
        %251 = vmatprep.subr.mxu0 0.0
        %252 = vmatpush1.msra.mxu0 0.0
        %253 = vmatprep.subr.mxu0 0.0
        %254 = vmatpush1.msra.mxu0 0.0
        %255 = vmatprep.subr.mxu0 0.0
        %256 = vmatpush1.msra.mxu0 0.0
        %257 = vmatprep.subr.mxu0 0.0
        %258 = vmatpush1.msra.mxu0 0.0
        %259 = vmatprep.subr.mxu0 0.0
        %260 = vmatpush1.msra.mxu0 0.0
        %261 = vmatprep.mubr.f32.mxu0 0.0
        %262 = vmatmul.mubr.f32.gmra.mrb[0].mxu0 %v179
        %v263 = vpop.f32.mrb[0].mxu0
        %v264 = vadd.f32 0.0, %v263
        %v265 = vpop.f32.mrb[0].mxu0
        %266 = vmatprep.mubr.f32.mxu0 0.0
        %267 = vmatmul.mubr.f32.gmra.mrb[0].mxu0 %v180
        %v268 = vpop.f32.mrb[0].mxu0
        %v269 = vadd.f32 0.0, %v268
        %v270 = vpop.f32.mrb[0].mxu0
        %271 = vdwg.mxu0
        %272 = vst [vmem:[%s176] sm:$0xff] %v264
        %273 = vst [vmem:[%s176 + $0x8] sm:$0xff] %v269
        %s274 = sand.u32 %s75, 1
        %s275 = scalar_lea.sflag [#allocation4], %s274
        %s276 = sand.u32 %s75, 1
        %s277 = smul.addr %s276, 16
        %s278 = scalar_lea.vmem [#allocation7], %s277
        // Predicated region
        $region37: #{tpu_custom_call.1} parent=27 // pred_check
          %p279 = pneg %p85
        $region38: #{tpu_custom_call.1} parent=27 // pred_check_branch
          %281 = sbr.rel (%p279) target = $region40
        $region39: #{tpu_custom_call.1} parent=27 // pred_region
          %s282 = smul.u32 2, %s20
          %s284 = ssub.s32 256, 256
          %285 = vsyncadd %s275, %s284
          %s286 = smul.addr %s282, 128
          %s287 = scalar_lea.hbm %s2, %s286
          %s288 = sshll.u32 %s278, 4
          %s289 = int_to_ptr.vmem [resolvable:$true] %s288
          %294 = dma.vmem_to_hbm [thread:$0]  %s289, 256, %s287, %s275, 128, 128, 8
        $region40: #{tpu_custom_call.1} parent=27 // pred_fallthru
          _
      $region28: #{tpu_custom_call.1} parent=5 // pred_fallthru
        _
      %p295 = scmp.le.s32.totalorder 2, %s15
      // Predicated region
      $region41: #{tpu_custom_call.1} parent=5 // pred_check
        %p296 = pneg %p295
      $region42: #{tpu_custom_call.1} parent=5 // pred_check_branch
        %298 = sbr.rel (%p296) target = $region44
      $region43: #{tpu_custom_call.1} parent=5 // pred_region
        %s299 = ssub.s32 %s15, 2
        // Predicated region
        $region45: #{tpu_custom_call.1} parent=43 // pred_check
          %p300 = pneg %p91
        $region46: #{tpu_custom_call.1} parent=43 // pred_check_branch
          %302 = sbr.rel (%p300) target = $region48
        $region47: #{tpu_custom_call.1} parent=43 // pred_region
          %s303 = sand.u32 %s76, 1
          %s304 = scalar_lea.sflag [#allocation4], %s303
          %s305 = sand.u32 %s76, 1
          %s306 = smul.addr %s305, 16
          %s307 = scalar_lea.vmem [#allocation7], %s306
          %308 = dma.done %s304, 256
        $region48: #{tpu_custom_call.1} parent=43 // pred_fallthru
          _
      $region44: #{tpu_custom_call.1} parent=5 // pred_fallthru
        _
    $region6: #{tpu_custom_call.1} parent=1 // loop_footer
      %s19 = sadd.s32 1, %s15
    $region7: #{tpu_custom_call.1} parent=1 // loop_footer_branch
      %14 = sbr.rel target = $region3
    $region8: #{tpu_custom_call.1} parent=1 // loop_exit
      _
    %309 = vsyncpa [#allocation3], 1
    %s310 = scalar_lea.sflag [#allocation3], 1
    %311 = vsyncpa %s310, 1
    %312 = vsyncpa [#allocation6], 1
    %313 = vsyncpa [#allocation4], 1
    %s314 = scalar_lea.sflag [#allocation4], 1
    %315 = vsyncpa %s314, 1

</llo_original>
